<compile_context>
chip_gen: v7x
topology: tpu7x:2x2x1
jax: 0.10.0
libtpu: 0.0.40
codegen_flags: <defaults>
</compile_context>

<pallas_src>
import jax
import jax.numpy as jnp
from jax import lax
from jax.experimental import pallas as pl
from jax.experimental.pallas import tpu as pltpu


def rnn_fc_kernel(g_ref, whh_ref, wfc_ref, bfc_ref, out_ref, h_ref):
    """One (batch_block, time_chunk) grid step of the serial recurrence.

    g_ref:   (Tc, Bb, Hp)  pre-projected gates  x_t @ W_ih^T + b_ih + b_hh
    whh_ref: (Hp, Hp)      hidden->hidden weight (transposed vs PyTorch, padded)
    wfc_ref: (Hp, Op)      fc weight (transposed vs PyTorch, padded)
    bfc_ref: (1, Op)       fc bias (padded)
    out_ref: (Bb, Op)      fc(h_T) for this batch block
    h_ref:   (Bb, Hp)      VMEM scratch carrying h across time chunks
    """
    t_blk = pl.program_id(1)

    @pl.when(t_blk == 0)
    def _init():
        h_ref[...] = jnp.zeros_like(h_ref)

    whh = whh_ref[...]          # loaded once per chunk, reused every step
    tc = g_ref.shape[0]

    def step(t, h):
        # one MXU matmul + one EUP tanh on the serial critical path
        return jnp.tanh(g_ref[t] + jnp.dot(h, whh,
                                           preferred_element_type=jnp.float32))

    # Bounded unroll: tc is the (small, static) chunk length, not full T.
    h_ref[...] = lax.fori_loop(0, tc, step, h_ref[...], unroll=True)

    @pl.when(t_blk == pl.num_programs(1) - 1)
    def _finalize():
        out_ref[...] = (jnp.dot(h_ref[...], wfc_ref[...],
                                preferred_element_type=jnp.float32)
                        + bfc_ref[...])


def _round_up(n, m):
    return ((n + m - 1) // m) * m


def _pick_time_chunk(t, cap=32):
    """Largest divisor of t that is <= cap (keeps the unroll bounded)."""
    for tc in range(min(t, cap), 0, -1):
        if t % tc == 0:
            return tc
    return t


def my_rnn_forward(x, params):
    """x: (B, T, I) float32 (batch_first, like the PyTorch module)."""
    w_ih, w_hh, b_ih, b_hh, w_fc, b_fc = params   # PyTorch-shaped params
    B, T, I = x.shape
    H = w_hh.shape[0]
    O = w_fc.shape[0]

    # Padded / blocked sizes (lane-dense last dims).
    Bp = _round_up(max(B, 8), 8)
    if Bp > 128:                      # large batch: 128-row blocks across cores
        Bp = _round_up(Bp, 128)
        Bb = 128
    else:
        Bb = Bp
    Hp = _round_up(max(H, 128), 128)
    Op = _round_up(max(O, 128), 128)
    Tc = _pick_time_chunk(T)
    nb, nt = Bp // Bb, T // Tc

    # --- glue (plain XLA): hoisted input projection + biases, time-major, padded
    # gates[t, b, :H] = x[b, t] @ W_ih^T + b_ih + b_hh   (one big matmul, M = T*B)
    gates = jnp.einsum('bti,hi->tbh', x, w_ih) + (b_ih + b_hh)          # (T, B, H)
    gates_p = jnp.pad(gates, ((0, 0), (0, Bp - B), (0, Hp - H)))        # (T, Bp, Hp)

    # zero-padded, lane-dense weights (padded rows/cols contribute exact zeros)
    whh_p = jnp.pad(w_hh.T, ((0, Hp - H), (0, Hp - H)))                 # (Hp, Hp)
    wfc_p = jnp.pad(w_fc.T, ((0, Hp - H), (0, Op - O)))                 # (Hp, Op)
    bfc_p = jnp.pad(b_fc[None, :], ((0, 0), (0, Op - O)))               # (1, Op)

    cost = pl.CostEstimate(
        flops=2 * T * Bp * Hp * Hp + 2 * Bp * Hp * Op,
        transcendentals=T * Bp * Hp,
        bytes_accessed=4 * (gates_p.size + whh_p.size + wfc_p.size
                            + bfc_p.size + Bp * Op),
    )

    out = pl.pallas_call(
        rnn_fc_kernel,
        out_shape=jax.ShapeDtypeStruct((Bp, Op), jnp.float32),
        grid_spec=pltpu.PrefetchScalarGridSpec(
            num_scalar_prefetch=0,
            grid=(nb, nt),                       # batch blocks, then time chunks
            in_specs=[
                pl.BlockSpec((Tc, Bb, Hp), lambda b, t: (t, b, 0)),
                pl.BlockSpec((Hp, Hp), lambda b, t: (0, 0)),
                pl.BlockSpec((Hp, Op), lambda b, t: (0, 0)),
                pl.BlockSpec((1, Op), lambda b, t: (0, 0)),
            ],
            out_specs=pl.BlockSpec((Bb, Op), lambda b, t: (b, 0)),
            scratch_shapes=[pltpu.VMEM((Bb, Hp), jnp.float32)],
        ),
        cost_estimate=cost,
        compiler_params=pltpu.CompilerParams(
            dimension_semantics=("parallel", "arbitrary")),
    )(gates_p, whh_p, wfc_p, bfc_p)

    return out[:B, :O]


def ref_forward(x, params):
    """Pure-JAX reference mirroring the PyTorch semantics."""
    w_ih, w_hh, b_ih, b_hh, w_fc, b_fc = params
    B, T, I = x.shape
    H = w_hh.shape[0]
    h = jnp.zeros((B, H), jnp.float32)
    for t in range(T):
        h = jnp.tanh(x[:, t, :] @ w_ih.T + b_ih + h @ w_hh.T + b_hh)
    return h @ w_fc.T + b_fc


def init_params(key, input_dim=2, hidden=64, output=2):
    # Deterministic synthetic init, PyTorch-style U(-1/sqrt(H), 1/sqrt(H)).
    ks = jax.random.split(key, 6)
    bound = 1.0 / jnp.sqrt(hidden)
    w_ih = jax.random.uniform(ks[0], (hidden, input_dim), jnp.float32, -bound, bound)
    w_hh = jax.random.uniform(ks[1], (hidden, hidden), jnp.float32, -bound, bound)
    b_ih = jax.random.uniform(ks[2], (hidden,), jnp.float32, -bound, bound)
    b_hh = jax.random.uniform(ks[3], (hidden,), jnp.float32, -bound, bound)
    w_fc = jax.random.uniform(ks[4], (output, hidden), jnp.float32, -bound, bound)
    b_fc = jax.random.uniform(ks[5], (output,), jnp.float32, -bound, bound)
    return (w_ih, w_hh, b_ih, b_hh, w_fc, b_fc)


if __name__ == "__main__":
    key = jax.random.PRNGKey(0)
    k_par, k_x = jax.random.split(key)

    B, T, INPUT, HIDDEN, OUTPUT = 2, 8, 2, 64, 2
    params = init_params(k_par, INPUT, HIDDEN, OUTPUT)
    x = jax.random.normal(k_x, (B, T, INPUT), jnp.float32)

    out = my_rnn_forward(x, params)
    out = jax.block_until_ready(out)

    ref = ref_forward(x, params)
    assert out.shape == (B, OUTPUT)
    assert jnp.allclose(out, ref, atol=1e-5, rtol=1e-5), (out, ref)

    print("KERNEL_OK")
</pallas_src>

<mosaic_0001>
module attributes {stable_mosaic.version = 11 : i64} {
  func.func @rnn_fc_kernel(%arg0: i32, %arg1: i32, %arg2: memref<8x8x128xf32, #tpu.memory_space<vmem>>, %arg3: memref<128x128xf32, #tpu.memory_space<vmem>>, %arg4: memref<128x128xf32, #tpu.memory_space<vmem>>, %arg5: memref<1x128xf32, #tpu.memory_space<vmem>>, %arg6: memref<8x128xf32, #tpu.memory_space<vmem>>, %arg7: memref<8x128xf32, #tpu.memory_space<vmem>>) attributes {dimension_semantics = [#tpu.dimension_semantics<parallel>, #tpu.dimension_semantics<arbitrary>], iteration_bounds = array<i64: 1, 1>, scalar_prefetch = 0 : i64, scratch_operands = 1 : i64, tpu.core_type = #tpu.core_type<tc>, window_params = [{transform_indices = @transform_0, window_bounds = array<i64: 8, 8, 128>}, {pipeline_mode = #tpu.pipeline_mode<synchronous>, transform_indices = @transform_1, window_bounds = array<i64: 128, 128>}, {pipeline_mode = #tpu.pipeline_mode<synchronous>, transform_indices = @transform_2, window_bounds = array<i64: 128, 128>}, {pipeline_mode = #tpu.pipeline_mode<synchronous>, transform_indices = @transform_3, window_bounds = array<i64: 1, 128>}, {transform_indices = @transform_4, window_bounds = array<i64: 8, 128>}]} {
    %c0_i32 = arith.constant 0 : i32
    %0 = arith.cmpi eq, %arg1, %c0_i32 : i32
    %1 = arith.extui %0 : i1 to i32
    %c0_i32_0 = arith.constant 0 : i32
    %2 = arith.cmpi ne, %1, %c0_i32_0 : i32
    scf.if %2 {
      %cst_32 = arith.constant 0.000000e+00 : f32
      %57 = vector.broadcast %cst_32 : f32 to vector<8x128xf32>
      %c0_33 = arith.constant 0 : index
      %c0_34 = arith.constant 0 : index
      %58 = vector.load %arg7[%c0_33, %c0_34] : memref<8x128xf32, #tpu.memory_space<vmem>>, vector<8x128xf32>
      tpu.vector_store %arg7[%c0_33, %c0_34], %57 {strides = array<i32>} : memref<8x128xf32, #tpu.memory_space<vmem>>, vector<8x128xf32>,
    } else {
    }
    %c0 = arith.constant 0 : index
    %c0_1 = arith.constant 0 : index
    %3 = vector.load %arg3[%c0, %c0_1] : memref<128x128xf32, #tpu.memory_space<vmem>>, vector<128x128xf32>
    %c0_2 = arith.constant 0 : index
    %c0_3 = arith.constant 0 : index
    %4 = vector.load %arg7[%c0_2, %c0_3] : memref<8x128xf32, #tpu.memory_space<vmem>>, vector<8x128xf32>
    %c0_i32_4 = arith.constant 0 : i32
    %5 = arith.index_cast %c0_i32_4 : i32 to index
    %c0_5 = arith.constant 0 : index
    %c0_6 = arith.constant 0 : index
    %6 = vector.load %arg2[%5, %c0_5, %c0_6] : memref<8x8x128xf32, #tpu.memory_space<vmem>>, vector<1x8x128xf32>
    %7 = vector.shape_cast %6 : vector<1x8x128xf32> to vector<8x128xf32>
    %cst = arith.constant dense<0.000000e+00> : vector<8x128xf32>
    %8 = tpu.matmul %4, %3, %cst {dimension_numbers = #tpu.dot_dimension_numbers<[1], [0], [0], [1], [0, 0, 1, 1], [], []>} : vector<8x128xf32>, vector<128x128xf32>, vector<8x128xf32> -> vector<8x128xf32>
    %9 = arith.addf %7, %8 : vector<8x128xf32>
    %10 = math.tanh %9 : vector<8x128xf32>
    %c1_i32 = arith.constant 1 : i32
    %11 = arith.index_cast %c1_i32 : i32 to index
    %c0_7 = arith.constant 0 : index
    %c0_8 = arith.constant 0 : index
    %12 = vector.load %arg2[%11, %c0_7, %c0_8] : memref<8x8x128xf32, #tpu.memory_space<vmem>>, vector<1x8x128xf32>
    %13 = vector.shape_cast %12 : vector<1x8x128xf32> to vector<8x128xf32>
    %cst_9 = arith.constant dense<0.000000e+00> : vector<8x128xf32>
    %14 = tpu.matmul %10, %3, %cst_9 {dimension_numbers = #tpu.dot_dimension_numbers<[1], [0], [0], [1], [0, 0, 1, 1], [], []>} : vector<8x128xf32>, vector<128x128xf32>, vector<8x128xf32> -> vector<8x128xf32>
    %15 = arith.addf %13, %14 : vector<8x128xf32>
    %16 = math.tanh %15 : vector<8x128xf32>
    %c2_i32 = arith.constant 2 : i32
    %17 = arith.index_cast %c2_i32 : i32 to index
    %c0_10 = arith.constant 0 : index
    %c0_11 = arith.constant 0 : index
    %18 = vector.load %arg2[%17, %c0_10, %c0_11] : memref<8x8x128xf32, #tpu.memory_space<vmem>>, vector<1x8x128xf32>
    %19 = vector.shape_cast %18 : vector<1x8x128xf32> to vector<8x128xf32>
    %cst_12 = arith.constant dense<0.000000e+00> : vector<8x128xf32>
    %20 = tpu.matmul %16, %3, %cst_12 {dimension_numbers = #tpu.dot_dimension_numbers<[1], [0], [0], [1], [0, 0, 1, 1], [], []>} : vector<8x128xf32>, vector<128x128xf32>, vector<8x128xf32> -> vector<8x128xf32>
    %21 = arith.addf %19, %20 : vector<8x128xf32>
    %22 = math.tanh %21 : vector<8x128xf32>
    %c3_i32 = arith.constant 3 : i32
    %23 = arith.index_cast %c3_i32 : i32 to index
    %c0_13 = arith.constant 0 : index
    %c0_14 = arith.constant 0 : index
    %24 = vector.load %arg2[%23, %c0_13, %c0_14] : memref<8x8x128xf32, #tpu.memory_space<vmem>>, vector<1x8x128xf32>
    %25 = vector.shape_cast %24 : vector<1x8x128xf32> to vector<8x128xf32>
    %cst_15 = arith.constant dense<0.000000e+00> : vector<8x128xf32>
    %26 = tpu.matmul %22, %3, %cst_15 {dimension_numbers = #tpu.dot_dimension_numbers<[1], [0], [0], [1], [0, 0, 1, 1], [], []>} : vector<8x128xf32>, vector<128x128xf32>, vector<8x128xf32> -> vector<8x128xf32>
    %27 = arith.addf %25, %26 : vector<8x128xf32>
    %28 = math.tanh %27 : vector<8x128xf32>
    %c4_i32 = arith.constant 4 : i32
    %29 = arith.index_cast %c4_i32 : i32 to index
    %c0_16 = arith.constant 0 : index
    %c0_17 = arith.constant 0 : index
    %30 = vector.load %arg2[%29, %c0_16, %c0_17] : memref<8x8x128xf32, #tpu.memory_space<vmem>>, vector<1x8x128xf32>
    %31 = vector.shape_cast %30 : vector<1x8x128xf32> to vector<8x128xf32>
    %cst_18 = arith.constant dense<0.000000e+00> : vector<8x128xf32>
    %32 = tpu.matmul %28, %3, %cst_18 {dimension_numbers = #tpu.dot_dimension_numbers<[1], [0], [0], [1], [0, 0, 1, 1], [], []>} : vector<8x128xf32>, vector<128x128xf32>, vector<8x128xf32> -> vector<8x128xf32>
    %33 = arith.addf %31, %32 : vector<8x128xf32>
    %34 = math.tanh %33 : vector<8x128xf32>
    %c5_i32 = arith.constant 5 : i32
    %35 = arith.index_cast %c5_i32 : i32 to index
    %c0_19 = arith.constant 0 : index
    %c0_20 = arith.constant 0 : index
    %36 = vector.load %arg2[%35, %c0_19, %c0_20] : memref<8x8x128xf32, #tpu.memory_space<vmem>>, vector<1x8x128xf32>
    %37 = vector.shape_cast %36 : vector<1x8x128xf32> to vector<8x128xf32>
    %cst_21 = arith.constant dense<0.000000e+00> : vector<8x128xf32>
    %38 = tpu.matmul %34, %3, %cst_21 {dimension_numbers = #tpu.dot_dimension_numbers<[1], [0], [0], [1], [0, 0, 1, 1], [], []>} : vector<8x128xf32>, vector<128x128xf32>, vector<8x128xf32> -> vector<8x128xf32>
    %39 = arith.addf %37, %38 : vector<8x128xf32>
    %40 = math.tanh %39 : vector<8x128xf32>
    %c6_i32 = arith.constant 6 : i32
    %41 = arith.index_cast %c6_i32 : i32 to index
    %c0_22 = arith.constant 0 : index
    %c0_23 = arith.constant 0 : index
    %42 = vector.load %arg2[%41, %c0_22, %c0_23] : memref<8x8x128xf32, #tpu.memory_space<vmem>>, vector<1x8x128xf32>
    %43 = vector.shape_cast %42 : vector<1x8x128xf32> to vector<8x128xf32>
    %cst_24 = arith.constant dense<0.000000e+00> : vector<8x128xf32>
    %44 = tpu.matmul %40, %3, %cst_24 {dimension_numbers = #tpu.dot_dimension_numbers<[1], [0], [0], [1], [0, 0, 1, 1], [], []>} : vector<8x128xf32>, vector<128x128xf32>, vector<8x128xf32> -> vector<8x128xf32>
    %45 = arith.addf %43, %44 : vector<8x128xf32>
    %46 = math.tanh %45 : vector<8x128xf32>
    %c7_i32 = arith.constant 7 : i32
    %47 = arith.index_cast %c7_i32 : i32 to index
    %c0_25 = arith.constant 0 : index
    %c0_26 = arith.constant 0 : index
    %48 = vector.load %arg2[%47, %c0_25, %c0_26] : memref<8x8x128xf32, #tpu.memory_space<vmem>>, vector<1x8x128xf32>
    %49 = vector.shape_cast %48 : vector<1x8x128xf32> to vector<8x128xf32>
    %cst_27 = arith.constant dense<0.000000e+00> : vector<8x128xf32>
    %50 = tpu.matmul %46, %3, %cst_27 {dimension_numbers = #tpu.dot_dimension_numbers<[1], [0], [0], [1], [0, 0, 1, 1], [], []>} : vector<8x128xf32>, vector<128x128xf32>, vector<8x128xf32> -> vector<8x128xf32>
    %51 = arith.addf %49, %50 : vector<8x128xf32>
    %52 = math.tanh %51 : vector<8x128xf32>
    %c8_i32 = arith.constant 8 : i32
    %c0_28 = arith.constant 0 : index
    %c0_29 = arith.constant 0 : index
    %53 = vector.load %arg7[%c0_28, %c0_29] : memref<8x128xf32, #tpu.memory_space<vmem>>, vector<8x128xf32>
    tpu.vector_store %arg7[%c0_28, %c0_29], %52 {strides = array<i32>} : memref<8x128xf32, #tpu.memory_space<vmem>>, vector<8x128xf32>,
    %c0_i32_30 = arith.constant 0 : i32
    %54 = arith.cmpi eq, %arg1, %c0_i32_30 : i32
    %55 = arith.extui %54 : i1 to i32
    %c0_i32_31 = arith.constant 0 : i32
    %56 = arith.cmpi ne, %55, %c0_i32_31 : i32
    scf.if %56 {
      %c0_32 = arith.constant 0 : index
      %c0_33 = arith.constant 0 : index
      %57 = vector.load %arg7[%c0_32, %c0_33] : memref<8x128xf32, #tpu.memory_space<vmem>>, vector<8x128xf32>
      %c0_34 = arith.constant 0 : index
      %c0_35 = arith.constant 0 : index
      %58 = vector.load %arg4[%c0_34, %c0_35] : memref<128x128xf32, #tpu.memory_space<vmem>>, vector<128x128xf32>
      %cst_36 = arith.constant dense<0.000000e+00> : vector<8x128xf32>
      %59 = tpu.matmul %57, %58, %cst_36 {dimension_numbers = #tpu.dot_dimension_numbers<[1], [0], [0], [1], [0, 0, 1, 1], [], []>} : vector<8x128xf32>, vector<128x128xf32>, vector<8x128xf32> -> vector<8x128xf32>
      %c0_37 = arith.constant 0 : index
      %c0_38 = arith.constant 0 : index
      %60 = vector.load %arg5[%c0_37, %c0_38] : memref<1x128xf32, #tpu.memory_space<vmem>>, vector<1x128xf32>
      %61 = vector.broadcast %60 : vector<1x128xf32> to vector<8x128xf32>
      %62 = arith.addf %59, %61 : vector<8x128xf32>
      %c0_39 = arith.constant 0 : index
      %c0_40 = arith.constant 0 : index
      %63 = vector.load %arg6[%c0_39, %c0_40] : memref<8x128xf32, #tpu.memory_space<vmem>>, vector<8x128xf32>
      tpu.vector_store %arg6[%c0_39, %c0_40], %62 {strides = array<i32>} : memref<8x128xf32, #tpu.memory_space<vmem>>, vector<8x128xf32>,
    } else {
    }
    return
  }
  func.func @transform_0(%arg0: i32, %arg1: i32) -> (i32, i32, i32) {
    %c0_i32 = arith.constant 0 : i32
    %c0_i32_0 = arith.constant 0 : i32
    return %arg1, %arg0, %c0_i32 : i32, i32, i32
  }
  func.func @transform_1(%arg0: i32, %arg1: i32) -> (i32, i32) {
    %c0_i32 = arith.constant 0 : i32
    %c0_i32_0 = arith.constant 0 : i32
    %c0_i32_1 = arith.constant 0 : i32
    return %c0_i32, %c0_i32_0 : i32, i32
  }
  func.func @transform_2(%arg0: i32, %arg1: i32) -> (i32, i32) {
    %c0_i32 = arith.constant 0 : i32
    %c0_i32_0 = arith.constant 0 : i32
    %c0_i32_1 = arith.constant 0 : i32
    return %c0_i32, %c0_i32_0 : i32, i32
  }
  func.func @transform_3(%arg0: i32, %arg1: i32) -> (i32, i32) {
    %c0_i32 = arith.constant 0 : i32
    %c0_i32_0 = arith.constant 0 : i32
    %c0_i32_1 = arith.constant 0 : i32
    return %c0_i32, %c0_i32_0 : i32, i32
  }
  func.func @transform_4(%arg0: i32, %arg1: i32) -> (i32, i32) {
    %c0_i32 = arith.constant 0 : i32
    %c0_i32_0 = arith.constant 0 : i32
    return %arg0, %c0_i32 : i32, i32
  }
}

</mosaic_0001>

<llo_original>
// kernel: tpu_custom_call.1
$region0: #{tpu_custom_call.1}
  #allocation0 [shape = 'u32[]', space=smem, size = 0x4, offset = 0x4, fixed_abs, tag = 'smem constant byte address 0x4 - core index']
  #allocation1 [shape = 'u32[144,128]{1,0:T(1,128)}', space=vmem, size = 0x12000, scoped, tag = 'internal scratch']
  #allocation2 [shape = 'f32[8,128]{1,0:T(8,128)}', space=vmem, size = 0x1000, scoped, tag = 'scratch operand']
  %s0 = inlined_call_operand.hbm [shape: f32[8,8,128], index: 0, kind: input, shape index: {}]
  %s1 = inlined_call_operand.hbm [shape: f32[128,128], index: 1, kind: input, shape index: {}]
  %s2 = inlined_call_operand.hbm [shape: f32[128,128], index: 2, kind: input, shape index: {}]
  %s3 = inlined_call_operand.vmem [shape: f32[1,128], index: 3, kind: input, shape index: {}]
  %s4 = inlined_call_operand.hbm [shape: f32[8,128], index: 4, kind: output, shape index: {}]
  %s5 = sld [smem:[#allocation0]]
  $region46: #{tpu_custom_call.1} parent=0
    _
  %s7 = ssub.s32 1, %s5
  %s8 = scalar_select 0, %s7, %s5
  $region1: #{tpu_custom_call.1} parent=0
    #allocation3 [shape = 'u8[32768]{0}', space=vmem, size = 0x8000, scoped, tag = 'input window, operand 0, single buffered']
    #allocation4 [shape = 's32[1]{0}', space=sflag, size = 0x4, scoped, tag = 'scoped memory for tpu_custom_call.1']
    #allocation5 [shape = 's32[1]{0}', space=sflag, size = 0x4, scoped, tag = 'scoped memory for tpu_custom_call.1']
    #allocation6 [shape = 'u8[65536]{0}', space=vmem, size = 0x10000, scoped, tag = 'input window, operand 1, single buffered']
    #allocation7 [shape = 's32[1]{0}', space=sflag, size = 0x4, scoped, tag = 'scoped memory for tpu_custom_call.1']
    #allocation8 [shape = 'u8[65536]{0}', space=vmem, size = 0x10000, scoped, tag = 'input window, operand 2, single buffered']
    #allocation9 [shape = 'u8[4096]{0}', space=vmem, size = 0x1000, scoped, tag = 'output window, operand 0, single buffered']
    %9 = vsyncpa [#allocation4], 0
    %10 = vsyncpa [#allocation7], 0
    %11 = vsyncpa [#allocation5], 0
    // Predicated region
    $region2: #{tpu_custom_call.1} parent=1 // pred_check
      _
    $region3: #{tpu_custom_call.1} parent=1 // pred_check_branch
      %13 = sbr.rel (0) target = $region5
    $region4: #{tpu_custom_call.1} parent=1 // pred_region
      %s15 = ssub.s32 1024, 1024
      %16 = vsyncadd [#allocation4], %s15
      %s17 = sshll.u32 [#allocation3], 4
      %s18 = int_to_ptr.vmem [resolvable:$true] %s17
      %23 = dma.hbm_to_vmem [thread:$0]  %s0, 1024, %s18, [#allocation4], 128, 128, 8
    $region5: #{tpu_custom_call.1} parent=1 // pred_fallthru
      _
    // Predicated region
    $region6: #{tpu_custom_call.1} parent=1 // pred_check
      _
    $region7: #{tpu_custom_call.1} parent=1 // pred_check_branch
      %25 = sbr.rel (0) target = $region9
    $region8: #{tpu_custom_call.1} parent=1 // pred_region
      %s27 = ssub.s32 2048, 2048
      %28 = vsyncadd [#allocation7], %s27
      %s29 = sshll.u32 [#allocation6], 4
      %s30 = int_to_ptr.vmem [resolvable:$true] %s29
      %35 = dma.hbm_to_vmem [thread:$0]  %s1, 2048, %s30, [#allocation7], 128, 128, 8
    $region9: #{tpu_custom_call.1} parent=1 // pred_fallthru
      _
    // Predicated region
    $region10: #{tpu_custom_call.1} parent=1 // pred_check
      _
    $region11: #{tpu_custom_call.1} parent=1 // pred_check_branch
      %37 = sbr.rel (0) target = $region13
    $region12: #{tpu_custom_call.1} parent=1 // pred_region
      %s39 = ssub.s32 2048, 2048
      %40 = vsyncadd [#allocation7], %s39
      %s41 = sshll.u32 [#allocation8], 4
      %s42 = int_to_ptr.vmem [resolvable:$true] %s41
      %47 = dma.hbm_to_vmem [thread:$0]  %s2, 2048, %s42, [#allocation7], 128, 128, 8
    $region13: #{tpu_custom_call.1} parent=1 // pred_fallthru
      _
    // Predicated region
    $region14: #{tpu_custom_call.1} parent=1 // pred_check
      _
    $region15: #{tpu_custom_call.1} parent=1 // pred_check_branch
      %49 = sbr.rel (0) target = $region17
    $region16: #{tpu_custom_call.1} parent=1 // pred_region
      _
    $region17: #{tpu_custom_call.1} parent=1 // pred_fallthru
      _
    // Predicated region
    $region18: #{tpu_custom_call.1} parent=1 // pred_check
      _
    $region19: #{tpu_custom_call.1} parent=1 // pred_check_branch
      %51 = sbr.rel (0) target = $region21
    $region20: #{tpu_custom_call.1} parent=1 // pred_region
      %52 = dma.done [#allocation4], 1024
    $region21: #{tpu_custom_call.1} parent=1 // pred_fallthru
      _
    // Predicated region
    $region22: #{tpu_custom_call.1} parent=1 // pred_check
      _
    $region23: #{tpu_custom_call.1} parent=1 // pred_check_branch
      %54 = sbr.rel (0) target = $region25
    $region24: #{tpu_custom_call.1} parent=1 // pred_region
      %55 = dma.done [#allocation7], 2048
    $region25: #{tpu_custom_call.1} parent=1 // pred_fallthru
      _
    // Predicated region
    $region26: #{tpu_custom_call.1} parent=1 // pred_check
      _
    $region27: #{tpu_custom_call.1} parent=1 // pred_check_branch
      %57 = sbr.rel (0) target = $region29
    $region28: #{tpu_custom_call.1} parent=1 // pred_region
      %58 = dma.done [#allocation7], 2048
    $region29: #{tpu_custom_call.1} parent=1 // pred_fallthru
      _
    %p59 = scmp.eq.s32.totalorder 0, 0
    // Predicated region
    $region30: #{tpu_custom_call.1} parent=1 // pred_check
      %p60 = pneg %p59
    $region31: #{tpu_custom_call.1} parent=1 // pred_check_branch
      %62 = sbr.rel (%p60) target = $region33
    $region32: #{tpu_custom_call.1} parent=1 // pred_region
      %63 = vst [vmem:[#allocation2] sm:$0xff] 0.0
    $region33: #{tpu_custom_call.1} parent=1 // pred_fallthru
      _
    %v64 = vld [vmem:[#allocation6] sm:$0xff]
    %v65 = vld [vmem:[#allocation6 + $0x8] sm:$0xff]
    %v66 = vld [vmem:[#allocation6 + $0x10] sm:$0xff]
    %v67 = vld [vmem:[#allocation6 + $0x18] sm:$0xff]
    %v68 = vld [vmem:[#allocation6 + $0x20] sm:$0xff]
    %v69 = vld [vmem:[#allocation6 + $0x28] sm:$0xff]
    %v70 = vld [vmem:[#allocation6 + $0x30] sm:$0xff]
    %v71 = vld [vmem:[#allocation6 + $0x38] sm:$0xff]
    %v72 = vld [vmem:[#allocation6 + $0x40] sm:$0xff]
    %v73 = vld [vmem:[#allocation6 + $0x48] sm:$0xff]
    %v74 = vld [vmem:[#allocation6 + $0x50] sm:$0xff]
    %v75 = vld [vmem:[#allocation6 + $0x58] sm:$0xff]
    %v76 = vld [vmem:[#allocation6 + $0x60] sm:$0xff]
    %v77 = vld [vmem:[#allocation6 + $0x68] sm:$0xff]
    %v78 = vld [vmem:[#allocation6 + $0x70] sm:$0xff]
    %v79 = vld [vmem:[#allocation6 + $0x78] sm:$0xff]
    %v80 = vld [vmem:[#allocation2] sm:$0xff]
    %v81 = vld [vmem:[#allocation3] sm:$0xff]
    %82 = vmatprep.subr.mxu0 0.0
    %83 = vmatpush1.msra.mxu0 %v64
    %84 = vmatprep.subr.mxu0 0.0
    %85 = vmatpush1.msra.mxu0 %v65
    %86 = vmatprep.subr.mxu0 0.0
    %87 = vmatpush1.msra.mxu0 %v66
    %88 = vmatprep.subr.mxu0 0.0
    %89 = vmatpush1.msra.mxu0 %v67
    %90 = vmatprep.subr.mxu0 0.0
    %91 = vmatpush1.msra.mxu0 %v68
    %92 = vmatprep.subr.mxu0 0.0
    %93 = vmatpush1.msra.mxu0 %v69
    %94 = vmatprep.subr.mxu0 0.0
    %95 = vmatpush1.msra.mxu0 %v70
    %96 = vmatprep.subr.mxu0 0.0
    %97 = vmatpush1.msra.mxu0 %v71
    %98 = vmatprep.subr.mxu0 0.0
    %99 = vmatpush1.msra.mxu0 %v72
    %100 = vmatprep.subr.mxu0 0.0
    %101 = vmatpush1.msra.mxu0 %v73
    %102 = vmatprep.subr.mxu0 0.0
    %103 = vmatpush1.msra.mxu0 %v74
    %104 = vmatprep.subr.mxu0 0.0
    %105 = vmatpush1.msra.mxu0 %v75
    %106 = vmatprep.subr.mxu0 0.0
    %107 = vmatpush1.msra.mxu0 %v76
    %108 = vmatprep.subr.mxu0 0.0
    %109 = vmatpush1.msra.mxu0 %v77
    %110 = vmatprep.subr.mxu0 0.0
    %111 = vmatpush1.msra.mxu0 %v78
    %112 = vmatprep.subr.mxu0 0.0
    %113 = vmatpush1.msra.mxu0 %v79
    %114 = vmatprep.subr.mxu0 0.0
    %115 = vmatpush1.msra.mxu0 0.0
    %116 = vmatprep.subr.mxu0 0.0
    %117 = vmatpush1.msra.mxu0 0.0
    %118 = vmatprep.subr.mxu0 0.0
    %119 = vmatpush1.msra.mxu0 0.0
    %120 = vmatprep.subr.mxu0 0.0
    %121 = vmatpush1.msra.mxu0 0.0
    %122 = vmatprep.subr.mxu0 0.0
    %123 = vmatpush1.msra.mxu0 0.0
    %124 = vmatprep.subr.mxu0 0.0
    %125 = vmatpush1.msra.mxu0 0.0
    %126 = vmatprep.subr.mxu0 0.0
    %127 = vmatpush1.msra.mxu0 0.0
    %128 = vmatprep.subr.mxu0 0.0
    %129 = vmatpush1.msra.mxu0 0.0
    %130 = vmatprep.subr.mxu0 0.0
    %131 = vmatpush1.msra.mxu0 0.0
    %132 = vmatprep.subr.mxu0 0.0
    %133 = vmatpush1.msra.mxu0 0.0
    %134 = vmatprep.subr.mxu0 0.0
    %135 = vmatpush1.msra.mxu0 0.0
    %136 = vmatprep.subr.mxu0 0.0
    %137 = vmatpush1.msra.mxu0 0.0
    %138 = vmatprep.subr.mxu0 0.0
    %139 = vmatpush1.msra.mxu0 0.0
    %140 = vmatprep.subr.mxu0 0.0
    %141 = vmatpush1.msra.mxu0 0.0
    %142 = vmatprep.subr.mxu0 0.0
    %143 = vmatpush1.msra.mxu0 0.0
    %144 = vmatprep.subr.mxu0 0.0
    %145 = vmatpush1.msra.mxu0 0.0
    %146 = vmatprep.mubr.f32.mxu0 0.0
    %147 = vmatmul.mubr.f32.gmra.mrb[0].mxu0 %v80
    %v148 = vpop.f32.mrb[0].mxu0
    %v149 = vadd.f32 0.0, %v148
    %v150 = vpop.f32.mrb[0].mxu0
    %151 = vdwg.mxu0
    %v152 = vadd.f32 %v81, %v149
    %v153 = vtanh.pop %v152
    %s154 = scalar_lea.vmem [#allocation3], 8
    %v155 = vld [vmem:[%s154] sm:$0xff]
    %156 = vmatprep.subr.mxu0 0.0
    %157 = vmatpush1.msra.mxu0 %v64
    %158 = vmatprep.subr.mxu0 0.0
    %159 = vmatpush1.msra.mxu0 %v65
    %160 = vmatprep.subr.mxu0 0.0
    %161 = vmatpush1.msra.mxu0 %v66
    %162 = vmatprep.subr.mxu0 0.0
    %163 = vmatpush1.msra.mxu0 %v67
    %164 = vmatprep.subr.mxu0 0.0
    %165 = vmatpush1.msra.mxu0 %v68
    %166 = vmatprep.subr.mxu0 0.0
    %167 = vmatpush1.msra.mxu0 %v69
    %168 = vmatprep.subr.mxu0 0.0
    %169 = vmatpush1.msra.mxu0 %v70
    %170 = vmatprep.subr.mxu0 0.0
    %171 = vmatpush1.msra.mxu0 %v71
    %172 = vmatprep.subr.mxu0 0.0
    %173 = vmatpush1.msra.mxu0 %v72
    %174 = vmatprep.subr.mxu0 0.0
    %175 = vmatpush1.msra.mxu0 %v73
    %176 = vmatprep.subr.mxu0 0.0
    %177 = vmatpush1.msra.mxu0 %v74
    %178 = vmatprep.subr.mxu0 0.0
    %179 = vmatpush1.msra.mxu0 %v75
    %180 = vmatprep.subr.mxu0 0.0
    %181 = vmatpush1.msra.mxu0 %v76
    %182 = vmatprep.subr.mxu0 0.0
    %183 = vmatpush1.msra.mxu0 %v77
    %184 = vmatprep.subr.mxu0 0.0
    %185 = vmatpush1.msra.mxu0 %v78
    %186 = vmatprep.subr.mxu0 0.0
    %187 = vmatpush1.msra.mxu0 %v79
    %188 = vmatprep.subr.mxu0 0.0
    %189 = vmatpush1.msra.mxu0 0.0
    %190 = vmatprep.subr.mxu0 0.0
    %191 = vmatpush1.msra.mxu0 0.0
    %192 = vmatprep.subr.mxu0 0.0
    %193 = vmatpush1.msra.mxu0 0.0
    %194 = vmatprep.subr.mxu0 0.0
    %195 = vmatpush1.msra.mxu0 0.0
    %196 = vmatprep.subr.mxu0 0.0
    %197 = vmatpush1.msra.mxu0 0.0
    %198 = vmatprep.subr.mxu0 0.0
    %199 = vmatpush1.msra.mxu0 0.0
    %200 = vmatprep.subr.mxu0 0.0
    %201 = vmatpush1.msra.mxu0 0.0
    %202 = vmatprep.subr.mxu0 0.0
    %203 = vmatpush1.msra.mxu0 0.0
    %204 = vmatprep.subr.mxu0 0.0
    %205 = vmatpush1.msra.mxu0 0.0
    %206 = vmatprep.subr.mxu0 0.0
    %207 = vmatpush1.msra.mxu0 0.0
    %208 = vmatprep.subr.mxu0 0.0
    %209 = vmatpush1.msra.mxu0 0.0
    %210 = vmatprep.subr.mxu0 0.0
    %211 = vmatpush1.msra.mxu0 0.0
    %212 = vmatprep.subr.mxu0 0.0
    %213 = vmatpush1.msra.mxu0 0.0
    %214 = vmatprep.subr.mxu0 0.0
    %215 = vmatpush1.msra.mxu0 0.0
    %216 = vmatprep.subr.mxu0 0.0
    %217 = vmatpush1.msra.mxu0 0.0
    %218 = vmatprep.subr.mxu0 0.0
    %219 = vmatpush1.msra.mxu0 0.0
    %220 = vmatprep.mubr.f32.mxu0 0.0
    %221 = vmatmul.mubr.f32.gmra.mrb[0].mxu0 %v153
    %v222 = vpop.f32.mrb[0].mxu0
    %v223 = vadd.f32 0.0, %v222
    %v224 = vpop.f32.mrb[0].mxu0
    %225 = vdwg.mxu0
    %v226 = vadd.f32 %v155, %v223
    %v227 = vtanh.pop %v226
    %s228 = scalar_lea.vmem [#allocation3], 16
    %v229 = vld [vmem:[%s228] sm:$0xff]
    %230 = vmatprep.subr.mxu0 0.0
    %231 = vmatpush1.msra.mxu0 %v64
    %232 = vmatprep.subr.mxu0 0.0
    %233 = vmatpush1.msra.mxu0 %v65
    %234 = vmatprep.subr.mxu0 0.0
    %235 = vmatpush1.msra.mxu0 %v66
    %236 = vmatprep.subr.mxu0 0.0
    %237 = vmatpush1.msra.mxu0 %v67
    %238 = vmatprep.subr.mxu0 0.0
    %239 = vmatpush1.msra.mxu0 %v68
    %240 = vmatprep.subr.mxu0 0.0
    %241 = vmatpush1.msra.mxu0 %v69
    %242 = vmatprep.subr.mxu0 0.0
    %243 = vmatpush1.msra.mxu0 %v70
    %244 = vmatprep.subr.mxu0 0.0
    %245 = vmatpush1.msra.mxu0 %v71
    %246 = vmatprep.subr.mxu0 0.0
    %247 = vmatpush1.msra.mxu0 %v72
    %248 = vmatprep.subr.mxu0 0.0
    %249 = vmatpush1.msra.mxu0 %v73
    %250 = vmatprep.subr.mxu0 0.0
    %251 = vmatpush1.msra.mxu0 %v74
    %252 = vmatprep.subr.mxu0 0.0
    %253 = vmatpush1.msra.mxu0 %v75
    %254 = vmatprep.subr.mxu0 0.0
    %255 = vmatpush1.msra.mxu0 %v76
    %256 = vmatprep.subr.mxu0 0.0
    %257 = vmatpush1.msra.mxu0 %v77
    %258 = vmatprep.subr.mxu0 0.0
    %259 = vmatpush1.msra.mxu0 %v78
    %260 = vmatprep.subr.mxu0 0.0
    %261 = vmatpush1.msra.mxu0 %v79
    %262 = vmatprep.subr.mxu0 0.0
    %263 = vmatpush1.msra.mxu0 0.0
    %264 = vmatprep.subr.mxu0 0.0
    %265 = vmatpush1.msra.mxu0 0.0
    %266 = vmatprep.subr.mxu0 0.0
    %267 = vmatpush1.msra.mxu0 0.0
    %268 = vmatprep.subr.mxu0 0.0
    %269 = vmatpush1.msra.mxu0 0.0
    %270 = vmatprep.subr.mxu0 0.0
    %271 = vmatpush1.msra.mxu0 0.0
    %272 = vmatprep.subr.mxu0 0.0
    %273 = vmatpush1.msra.mxu0 0.0
    %274 = vmatprep.subr.mxu0 0.0
    %275 = vmatpush1.msra.mxu0 0.0
    %276 = vmatprep.subr.mxu0 0.0
    %277 = vmatpush1.msra.mxu0 0.0
    %278 = vmatprep.subr.mxu0 0.0
    %279 = vmatpush1.msra.mxu0 0.0
    %280 = vmatprep.subr.mxu0 0.0
    %281 = vmatpush1.msra.mxu0 0.0
    %282 = vmatprep.subr.mxu0 0.0
    %283 = vmatpush1.msra.mxu0 0.0
    %284 = vmatprep.subr.mxu0 0.0
    %285 = vmatpush1.msra.mxu0 0.0
    %286 = vmatprep.subr.mxu0 0.0
    %287 = vmatpush1.msra.mxu0 0.0
    %288 = vmatprep.subr.mxu0 0.0
    %289 = vmatpush1.msra.mxu0 0.0
    %290 = vmatprep.subr.mxu0 0.0
    %291 = vmatpush1.msra.mxu0 0.0
    %292 = vmatprep.subr.mxu0 0.0
    %293 = vmatpush1.msra.mxu0 0.0
    %294 = vmatprep.mubr.f32.mxu0 0.0
    %295 = vmatmul.mubr.f32.gmra.mrb[0].mxu0 %v227
    %v296 = vpop.f32.mrb[0].mxu0
    %v297 = vadd.f32 0.0, %v296
    %v298 = vpop.f32.mrb[0].mxu0
    %299 = vdwg.mxu0
    %v300 = vadd.f32 %v229, %v297
    %v301 = vtanh.pop %v300
    %s302 = scalar_lea.vmem [#allocation3], 24
    %v303 = vld [vmem:[%s302] sm:$0xff]
    %304 = vmatprep.subr.mxu0 0.0
    %305 = vmatpush1.msra.mxu0 %v64
    %306 = vmatprep.subr.mxu0 0.0
    %307 = vmatpush1.msra.mxu0 %v65
    %308 = vmatprep.subr.mxu0 0.0
    %309 = vmatpush1.msra.mxu0 %v66
    %310 = vmatprep.subr.mxu0 0.0
    %311 = vmatpush1.msra.mxu0 %v67
    %312 = vmatprep.subr.mxu0 0.0
    %313 = vmatpush1.msra.mxu0 %v68
    %314 = vmatprep.subr.mxu0 0.0
    %315 = vmatpush1.msra.mxu0 %v69
    %316 = vmatprep.subr.mxu0 0.0
    %317 = vmatpush1.msra.mxu0 %v70
    %318 = vmatprep.subr.mxu0 0.0
    %319 = vmatpush1.msra.mxu0 %v71
    %320 = vmatprep.subr.mxu0 0.0
    %321 = vmatpush1.msra.mxu0 %v72
    %322 = vmatprep.subr.mxu0 0.0
    %323 = vmatpush1.msra.mxu0 %v73
    %324 = vmatprep.subr.mxu0 0.0
    %325 = vmatpush1.msra.mxu0 %v74
    %326 = vmatprep.subr.mxu0 0.0
    %327 = vmatpush1.msra.mxu0 %v75
    %328 = vmatprep.subr.mxu0 0.0
    %329 = vmatpush1.msra.mxu0 %v76
    %330 = vmatprep.subr.mxu0 0.0
    %331 = vmatpush1.msra.mxu0 %v77
    %332 = vmatprep.subr.mxu0 0.0
    %333 = vmatpush1.msra.mxu0 %v78
    %334 = vmatprep.subr.mxu0 0.0
    %335 = vmatpush1.msra.mxu0 %v79
    %336 = vmatprep.subr.mxu0 0.0
    %337 = vmatpush1.msra.mxu0 0.0
    %338 = vmatprep.subr.mxu0 0.0
    %339 = vmatpush1.msra.mxu0 0.0
    %340 = vmatprep.subr.mxu0 0.0
    %341 = vmatpush1.msra.mxu0 0.0
    %342 = vmatprep.subr.mxu0 0.0
    %343 = vmatpush1.msra.mxu0 0.0
    %344 = vmatprep.subr.mxu0 0.0
    %345 = vmatpush1.msra.mxu0 0.0
    %346 = vmatprep.subr.mxu0 0.0
    %347 = vmatpush1.msra.mxu0 0.0
    %348 = vmatprep.subr.mxu0 0.0
    %349 = vmatpush1.msra.mxu0 0.0
    %350 = vmatprep.subr.mxu0 0.0
    %351 = vmatpush1.msra.mxu0 0.0
    %352 = vmatprep.subr.mxu0 0.0
    %353 = vmatpush1.msra.mxu0 0.0
    %354 = vmatprep.subr.mxu0 0.0
    %355 = vmatpush1.msra.mxu0 0.0
    %356 = vmatprep.subr.mxu0 0.0
    %357 = vmatpush1.msra.mxu0 0.0
    %358 = vmatprep.subr.mxu0 0.0
    %359 = vmatpush1.msra.mxu0 0.0
    %360 = vmatprep.subr.mxu0 0.0
    %361 = vmatpush1.msra.mxu0 0.0
    %362 = vmatprep.subr.mxu0 0.0
    %363 = vmatpush1.msra.mxu0 0.0
    %364 = vmatprep.subr.mxu0 0.0
    %365 = vmatpush1.msra.mxu0 0.0
    %366 = vmatprep.subr.mxu0 0.0
    %367 = vmatpush1.msra.mxu0 0.0
    %368 = vmatprep.mubr.f32.mxu0 0.0
    %369 = vmatmul.mubr.f32.gmra.mrb[0].mxu0 %v301
    %v370 = vpop.f32.mrb[0].mxu0
    %v371 = vadd.f32 0.0, %v370
    %v372 = vpop.f32.mrb[0].mxu0
    %373 = vdwg.mxu0
    %v374 = vadd.f32 %v303, %v371
    %v375 = vtanh.pop %v374
    %s376 = scalar_lea.vmem [#allocation3], 32
    %v377 = vld [vmem:[%s376] sm:$0xff]
    %378 = vmatprep.subr.mxu0 0.0
    %379 = vmatpush1.msra.mxu0 %v64
    %380 = vmatprep.subr.mxu0 0.0
    %381 = vmatpush1.msra.mxu0 %v65
    %382 = vmatprep.subr.mxu0 0.0
    %383 = vmatpush1.msra.mxu0 %v66
    %384 = vmatprep.subr.mxu0 0.0
    %385 = vmatpush1.msra.mxu0 %v67
    %386 = vmatprep.subr.mxu0 0.0
    %387 = vmatpush1.msra.mxu0 %v68
    %388 = vmatprep.subr.mxu0 0.0
    %389 = vmatpush1.msra.mxu0 %v69
    %390 = vmatprep.subr.mxu0 0.0
    %391 = vmatpush1.msra.mxu0 %v70
    %392 = vmatprep.subr.mxu0 0.0
    %393 = vmatpush1.msra.mxu0 %v71
    %394 = vmatprep.subr.mxu0 0.0
    %395 = vmatpush1.msra.mxu0 %v72
    %396 = vmatprep.subr.mxu0 0.0
    %397 = vmatpush1.msra.mxu0 %v73
    %398 = vmatprep.subr.mxu0 0.0
    %399 = vmatpush1.msra.mxu0 %v74
    %400 = vmatprep.subr.mxu0 0.0
    %401 = vmatpush1.msra.mxu0 %v75
    %402 = vmatprep.subr.mxu0 0.0
    %403 = vmatpush1.msra.mxu0 %v76
    %404 = vmatprep.subr.mxu0 0.0
    %405 = vmatpush1.msra.mxu0 %v77
    %406 = vmatprep.subr.mxu0 0.0
    %407 = vmatpush1.msra.mxu0 %v78
    %408 = vmatprep.subr.mxu0 0.0
    %409 = vmatpush1.msra.mxu0 %v79
    %410 = vmatprep.subr.mxu0 0.0
    %411 = vmatpush1.msra.mxu0 0.0
    %412 = vmatprep.subr.mxu0 0.0
    %413 = vmatpush1.msra.mxu0 0.0
    %414 = vmatprep.subr.mxu0 0.0
    %415 = vmatpush1.msra.mxu0 0.0
    %416 = vmatprep.subr.mxu0 0.0
    %417 = vmatpush1.msra.mxu0 0.0
    %418 = vmatprep.subr.mxu0 0.0
    %419 = vmatpush1.msra.mxu0 0.0
    %420 = vmatprep.subr.mxu0 0.0
    %421 = vmatpush1.msra.mxu0 0.0
    %422 = vmatprep.subr.mxu0 0.0
    %423 = vmatpush1.msra.mxu0 0.0
    %424 = vmatprep.subr.mxu0 0.0
    %425 = vmatpush1.msra.mxu0 0.0
    %426 = vmatprep.subr.mxu0 0.0
    %427 = vmatpush1.msra.mxu0 0.0
    %428 = vmatprep.subr.mxu0 0.0
    %429 = vmatpush1.msra.mxu0 0.0
    %430 = vmatprep.subr.mxu0 0.0
    %431 = vmatpush1.msra.mxu0 0.0
    %432 = vmatprep.subr.mxu0 0.0
    %433 = vmatpush1.msra.mxu0 0.0
    %434 = vmatprep.subr.mxu0 0.0
    %435 = vmatpush1.msra.mxu0 0.0
    %436 = vmatprep.subr.mxu0 0.0
    %437 = vmatpush1.msra.mxu0 0.0
    %438 = vmatprep.subr.mxu0 0.0
    %439 = vmatpush1.msra.mxu0 0.0
    %440 = vmatprep.subr.mxu0 0.0
    %441 = vmatpush1.msra.mxu0 0.0
    %442 = vmatprep.mubr.f32.mxu0 0.0
    %443 = vmatmul.mubr.f32.gmra.mrb[0].mxu0 %v375
    %v444 = vpop.f32.mrb[0].mxu0
    %v445 = vadd.f32 0.0, %v444
    %v446 = vpop.f32.mrb[0].mxu0
    %447 = vdwg.mxu0
    %v448 = vadd.f32 %v377, %v445
    %v449 = vtanh.pop %v448
    %s450 = scalar_lea.vmem [#allocation3], 40
    %v451 = vld [vmem:[%s450] sm:$0xff]
    %452 = vmatprep.subr.mxu0 0.0
    %453 = vmatpush1.msra.mxu0 %v64
    %454 = vmatprep.subr.mxu0 0.0
    %455 = vmatpush1.msra.mxu0 %v65
    %456 = vmatprep.subr.mxu0 0.0
    %457 = vmatpush1.msra.mxu0 %v66
    %458 = vmatprep.subr.mxu0 0.0
    %459 = vmatpush1.msra.mxu0 %v67
    %460 = vmatprep.subr.mxu0 0.0
    %461 = vmatpush1.msra.mxu0 %v68
    %462 = vmatprep.subr.mxu0 0.0
    %463 = vmatpush1.msra.mxu0 %v69
    %464 = vmatprep.subr.mxu0 0.0
    %465 = vmatpush1.msra.mxu0 %v70
    %466 = vmatprep.subr.mxu0 0.0
    %467 = vmatpush1.msra.mxu0 %v71
    %468 = vmatprep.subr.mxu0 0.0
    %469 = vmatpush1.msra.mxu0 %v72
    %470 = vmatprep.subr.mxu0 0.0
    %471 = vmatpush1.msra.mxu0 %v73
    %472 = vmatprep.subr.mxu0 0.0
    %473 = vmatpush1.msra.mxu0 %v74
    %474 = vmatprep.subr.mxu0 0.0
    %475 = vmatpush1.msra.mxu0 %v75
    %476 = vmatprep.subr.mxu0 0.0
    %477 = vmatpush1.msra.mxu0 %v76
    %478 = vmatprep.subr.mxu0 0.0
    %479 = vmatpush1.msra.mxu0 %v77
    %480 = vmatprep.subr.mxu0 0.0
    %481 = vmatpush1.msra.mxu0 %v78
    %482 = vmatprep.subr.mxu0 0.0
    %483 = vmatpush1.msra.mxu0 %v79
    %484 = vmatprep.subr.mxu0 0.0
    %485 = vmatpush1.msra.mxu0 0.0
    %486 = vmatprep.subr.mxu0 0.0
    %487 = vmatpush1.msra.mxu0 0.0
    %488 = vmatprep.subr.mxu0 0.0
    %489 = vmatpush1.msra.mxu0 0.0
    %490 = vmatprep.subr.mxu0 0.0
    %491 = vmatpush1.msra.mxu0 0.0
    %492 = vmatprep.subr.mxu0 0.0
    %493 = vmatpush1.msra.mxu0 0.0
    %494 = vmatprep.subr.mxu0 0.0
    %495 = vmatpush1.msra.mxu0 0.0
    %496 = vmatprep.subr.mxu0 0.0
    %497 = vmatpush1.msra.mxu0 0.0
    %498 = vmatprep.subr.mxu0 0.0
    %499 = vmatpush1.msra.mxu0 0.0
    %500 = vmatprep.subr.mxu0 0.0
    %501 = vmatpush1.msra.mxu0 0.0
    %502 = vmatprep.subr.mxu0 0.0
    %503 = vmatpush1.msra.mxu0 0.0
    %504 = vmatprep.subr.mxu0 0.0
    %505 = vmatpush1.msra.mxu0 0.0
    %506 = vmatprep.subr.mxu0 0.0
    %507 = vmatpush1.msra.mxu0 0.0
    %508 = vmatprep.subr.mxu0 0.0
    %509 = vmatpush1.msra.mxu0 0.0
    %510 = vmatprep.subr.mxu0 0.0
    %511 = vmatpush1.msra.mxu0 0.0
    %512 = vmatprep.subr.mxu0 0.0
    %513 = vmatpush1.msra.mxu0 0.0
    %514 = vmatprep.subr.mxu0 0.0
    %515 = vmatpush1.msra.mxu0 0.0
    %516 = vmatprep.mubr.f32.mxu0 0.0
    %517 = vmatmul.mubr.f32.gmra.mrb[0].mxu0 %v449
    %v518 = vpop.f32.mrb[0].mxu0
    %v519 = vadd.f32 0.0, %v518
    %v520 = vpop.f32.mrb[0].mxu0
    %521 = vdwg.mxu0
    %v522 = vadd.f32 %v451, %v519
    %v523 = vtanh.pop %v522
    %s524 = scalar_lea.vmem [#allocation3], 48
    %v525 = vld [vmem:[%s524] sm:$0xff]
    %526 = vmatprep.subr.mxu0 0.0
    %527 = vmatpush1.msra.mxu0 %v64
    %528 = vmatprep.subr.mxu0 0.0
    %529 = vmatpush1.msra.mxu0 %v65
    %530 = vmatprep.subr.mxu0 0.0
    %531 = vmatpush1.msra.mxu0 %v66
    %532 = vmatprep.subr.mxu0 0.0
    %533 = vmatpush1.msra.mxu0 %v67
    %534 = vmatprep.subr.mxu0 0.0
    %535 = vmatpush1.msra.mxu0 %v68
    %536 = vmatprep.subr.mxu0 0.0
    %537 = vmatpush1.msra.mxu0 %v69
    %538 = vmatprep.subr.mxu0 0.0
    %539 = vmatpush1.msra.mxu0 %v70
    %540 = vmatprep.subr.mxu0 0.0
    %541 = vmatpush1.msra.mxu0 %v71
    %542 = vmatprep.subr.mxu0 0.0
    %543 = vmatpush1.msra.mxu0 %v72
    %544 = vmatprep.subr.mxu0 0.0
    %545 = vmatpush1.msra.mxu0 %v73
    %546 = vmatprep.subr.mxu0 0.0
    %547 = vmatpush1.msra.mxu0 %v74
    %548 = vmatprep.subr.mxu0 0.0
    %549 = vmatpush1.msra.mxu0 %v75
    %550 = vmatprep.subr.mxu0 0.0
    %551 = vmatpush1.msra.mxu0 %v76
    %552 = vmatprep.subr.mxu0 0.0
    %553 = vmatpush1.msra.mxu0 %v77
    %554 = vmatprep.subr.mxu0 0.0
    %555 = vmatpush1.msra.mxu0 %v78
    %556 = vmatprep.subr.mxu0 0.0
    %557 = vmatpush1.msra.mxu0 %v79
    %558 = vmatprep.subr.mxu0 0.0
    %559 = vmatpush1.msra.mxu0 0.0
    %560 = vmatprep.subr.mxu0 0.0
    %561 = vmatpush1.msra.mxu0 0.0
    %562 = vmatprep.subr.mxu0 0.0
    %563 = vmatpush1.msra.mxu0 0.0
    %564 = vmatprep.subr.mxu0 0.0
    %565 = vmatpush1.msra.mxu0 0.0
    %566 = vmatprep.subr.mxu0 0.0
    %567 = vmatpush1.msra.mxu0 0.0
    %568 = vmatprep.subr.mxu0 0.0
    %569 = vmatpush1.msra.mxu0 0.0
    %570 = vmatprep.subr.mxu0 0.0
    %571 = vmatpush1.msra.mxu0 0.0
    %572 = vmatprep.subr.mxu0 0.0
    %573 = vmatpush1.msra.mxu0 0.0
    %574 = vmatprep.subr.mxu0 0.0
    %575 = vmatpush1.msra.mxu0 0.0
    %576 = vmatprep.subr.mxu0 0.0
    %577 = vmatpush1.msra.mxu0 0.0
    %578 = vmatprep.subr.mxu0 0.0
    %579 = vmatpush1.msra.mxu0 0.0
    %580 = vmatprep.subr.mxu0 0.0
    %581 = vmatpush1.msra.mxu0 0.0
    %582 = vmatprep.subr.mxu0 0.0
    %583 = vmatpush1.msra.mxu0 0.0
    %584 = vmatprep.subr.mxu0 0.0
    %585 = vmatpush1.msra.mxu0 0.0
    %586 = vmatprep.subr.mxu0 0.0
    %587 = vmatpush1.msra.mxu0 0.0
    %588 = vmatprep.subr.mxu0 0.0
    %589 = vmatpush1.msra.mxu0 0.0
    %590 = vmatprep.mubr.f32.mxu0 0.0
    %591 = vmatmul.mubr.f32.gmra.mrb[0].mxu0 %v523
    %v592 = vpop.f32.mrb[0].mxu0
    %v593 = vadd.f32 0.0, %v592
    %v594 = vpop.f32.mrb[0].mxu0
    %595 = vdwg.mxu0
    %v596 = vadd.f32 %v525, %v593
    %v597 = vtanh.pop %v596
    %s598 = scalar_lea.vmem [#allocation3], 56
    %v599 = vld [vmem:[%s598] sm:$0xff]
    %600 = vmatprep.subr.mxu0 0.0
    %601 = vmatpush1.msra.mxu0 %v64
    %602 = vmatprep.subr.mxu0 0.0
    %603 = vmatpush1.msra.mxu0 %v65
    %604 = vmatprep.subr.mxu0 0.0
    %605 = vmatpush1.msra.mxu0 %v66
    %606 = vmatprep.subr.mxu0 0.0
    %607 = vmatpush1.msra.mxu0 %v67
    %608 = vmatprep.subr.mxu0 0.0
    %609 = vmatpush1.msra.mxu0 %v68
    %610 = vmatprep.subr.mxu0 0.0
    %611 = vmatpush1.msra.mxu0 %v69
    %612 = vmatprep.subr.mxu0 0.0
    %613 = vmatpush1.msra.mxu0 %v70
    %614 = vmatprep.subr.mxu0 0.0
    %615 = vmatpush1.msra.mxu0 %v71
    %616 = vmatprep.subr.mxu0 0.0
    %617 = vmatpush1.msra.mxu0 %v72
    %618 = vmatprep.subr.mxu0 0.0
    %619 = vmatpush1.msra.mxu0 %v73
    %620 = vmatprep.subr.mxu0 0.0
    %621 = vmatpush1.msra.mxu0 %v74
    %622 = vmatprep.subr.mxu0 0.0
    %623 = vmatpush1.msra.mxu0 %v75
    %624 = vmatprep.subr.mxu0 0.0
    %625 = vmatpush1.msra.mxu0 %v76
    %626 = vmatprep.subr.mxu0 0.0
    %627 = vmatpush1.msra.mxu0 %v77
    %628 = vmatprep.subr.mxu0 0.0
    %629 = vmatpush1.msra.mxu0 %v78
    %630 = vmatprep.subr.mxu0 0.0
    %631 = vmatpush1.msra.mxu0 %v79
    %632 = vmatprep.subr.mxu0 0.0
    %633 = vmatpush1.msra.mxu0 0.0
    %634 = vmatprep.subr.mxu0 0.0
    %635 = vmatpush1.msra.mxu0 0.0
    %636 = vmatprep.subr.mxu0 0.0
    %637 = vmatpush1.msra.mxu0 0.0
    %638 = vmatprep.subr.mxu0 0.0
    %639 = vmatpush1.msra.mxu0 0.0
    %640 = vmatprep.subr.mxu0 0.0
    %641 = vmatpush1.msra.mxu0 0.0
    %642 = vmatprep.subr.mxu0 0.0
    %643 = vmatpush1.msra.mxu0 0.0
    %644 = vmatprep.subr.mxu0 0.0
    %645 = vmatpush1.msra.mxu0 0.0
    %646 = vmatprep.subr.mxu0 0.0
    %647 = vmatpush1.msra.mxu0 0.0
    %648 = vmatprep.subr.mxu0 0.0
    %649 = vmatpush1.msra.mxu0 0.0
    %650 = vmatprep.subr.mxu0 0.0
    %651 = vmatpush1.msra.mxu0 0.0
    %652 = vmatprep.subr.mxu0 0.0
    %653 = vmatpush1.msra.mxu0 0.0
    %654 = vmatprep.subr.mxu0 0.0
    %655 = vmatpush1.msra.mxu0 0.0
    %656 = vmatprep.subr.mxu0 0.0
    %657 = vmatpush1.msra.mxu0 0.0
    %658 = vmatprep.subr.mxu0 0.0
    %659 = vmatpush1.msra.mxu0 0.0
    %660 = vmatprep.subr.mxu0 0.0
    %661 = vmatpush1.msra.mxu0 0.0
    %662 = vmatprep.subr.mxu0 0.0
    %663 = vmatpush1.msra.mxu0 0.0
    %664 = vmatprep.mubr.f32.mxu0 0.0
    %665 = vmatmul.mubr.f32.gmra.mrb[0].mxu0 %v597
    %v666 = vpop.f32.mrb[0].mxu0
    %v667 = vadd.f32 0.0, %v666
    %v668 = vpop.f32.mrb[0].mxu0
    %669 = vdwg.mxu0
    %v670 = vadd.f32 %v599, %v667
    %v671 = vtanh.pop %v670
    %672 = vst [vmem:[#allocation2] sm:$0xff] %v671
    // Predicated region
    $region34: #{tpu_custom_call.1} parent=1 // pred_check
      %p673 = pneg %p59
    $region35: #{tpu_custom_call.1} parent=1 // pred_check_branch
      %675 = sbr.rel (%p673) target = $region37
    $region36: #{tpu_custom_call.1} parent=1 // pred_region
      %v676 = vld [vmem:[#allocation2] sm:$0xff]
      %v677 = vld [vmem:[#allocation8] sm:$0xff]
      %v678 = vld [vmem:[#allocation8 + $0x8] sm:$0xff]
      %v679 = vld [vmem:[#allocation8 + $0x10] sm:$0xff]
      %v680 = vld [vmem:[#allocation8 + $0x18] sm:$0xff]
      %v681 = vld [vmem:[#allocation8 + $0x20] sm:$0xff]
      %v682 = vld [vmem:[#allocation8 + $0x28] sm:$0xff]
      %v683 = vld [vmem:[#allocation8 + $0x30] sm:$0xff]
      %v684 = vld [vmem:[#allocation8 + $0x38] sm:$0xff]
      %v685 = vld [vmem:[#allocation8 + $0x40] sm:$0xff]
      %v686 = vld [vmem:[#allocation8 + $0x48] sm:$0xff]
      %v687 = vld [vmem:[#allocation8 + $0x50] sm:$0xff]
      %v688 = vld [vmem:[#allocation8 + $0x58] sm:$0xff]
      %v689 = vld [vmem:[#allocation8 + $0x60] sm:$0xff]
      %v690 = vld [vmem:[#allocation8 + $0x68] sm:$0xff]
      %v691 = vld [vmem:[#allocation8 + $0x70] sm:$0xff]
      %v692 = vld [vmem:[#allocation8 + $0x78] sm:$0xff]
      %v693 = vld [vmem:[%s3] sm:$0x1]
      %v695 = vlaneseq
      %v696 = vshrl.u32 %v695, 7
      %v697 = vsub.s32 0, %v696
      %v698 = vrot.slane %v693, %v697
      %700 = vmatprep.subr.mxu0 0.0
      %701 = vmatpush1.msra.mxu0 %v677
      %702 = vmatprep.subr.mxu0 0.0
      %703 = vmatpush1.msra.mxu0 %v678
      %704 = vmatprep.subr.mxu0 0.0
      %705 = vmatpush1.msra.mxu0 %v679
      %706 = vmatprep.subr.mxu0 0.0
      %707 = vmatpush1.msra.mxu0 %v680
      %708 = vmatprep.subr.mxu0 0.0
      %709 = vmatpush1.msra.mxu0 %v681
      %710 = vmatprep.subr.mxu0 0.0
      %711 = vmatpush1.msra.mxu0 %v682
      %712 = vmatprep.subr.mxu0 0.0
      %713 = vmatpush1.msra.mxu0 %v683
      %714 = vmatprep.subr.mxu0 0.0
      %715 = vmatpush1.msra.mxu0 %v684
      %716 = vmatprep.subr.mxu0 0.0
      %717 = vmatpush1.msra.mxu0 %v685
      %718 = vmatprep.subr.mxu0 0.0
      %719 = vmatpush1.msra.mxu0 %v686
      %720 = vmatprep.subr.mxu0 0.0
      %721 = vmatpush1.msra.mxu0 %v687
      %722 = vmatprep.subr.mxu0 0.0
      %723 = vmatpush1.msra.mxu0 %v688
      %724 = vmatprep.subr.mxu0 0.0
      %725 = vmatpush1.msra.mxu0 %v689
      %726 = vmatprep.subr.mxu0 0.0
      %727 = vmatpush1.msra.mxu0 %v690
      %728 = vmatprep.subr.mxu0 0.0
      %729 = vmatpush1.msra.mxu0 %v691
      %730 = vmatprep.subr.mxu0 0.0
      %731 = vmatpush1.msra.mxu0 %v692
      %732 = vmatprep.subr.mxu0 0.0
      %733 = vmatpush1.msra.mxu0 0.0
      %734 = vmatprep.subr.mxu0 0.0
      %735 = vmatpush1.msra.mxu0 0.0
      %736 = vmatprep.subr.mxu0 0.0
      %737 = vmatpush1.msra.mxu0 0.0
      %738 = vmatprep.subr.mxu0 0.0
      %739 = vmatpush1.msra.mxu0 0.0
      %740 = vmatprep.subr.mxu0 0.0
      %741 = vmatpush1.msra.mxu0 0.0
      %742 = vmatprep.subr.mxu0 0.0
      %743 = vmatpush1.msra.mxu0 0.0
      %744 = vmatprep.subr.mxu0 0.0
      %745 = vmatpush1.msra.mxu0 0.0
      %746 = vmatprep.subr.mxu0 0.0
      %747 = vmatpush1.msra.mxu0 0.0
      %748 = vmatprep.subr.mxu0 0.0
      %749 = vmatpush1.msra.mxu0 0.0
      %750 = vmatprep.subr.mxu0 0.0
      %751 = vmatpush1.msra.mxu0 0.0
      %752 = vmatprep.subr.mxu0 0.0
      %753 = vmatpush1.msra.mxu0 0.0
      %754 = vmatprep.subr.mxu0 0.0
      %755 = vmatpush1.msra.mxu0 0.0
      %756 = vmatprep.subr.mxu0 0.0
      %757 = vmatpush1.msra.mxu0 0.0
      %758 = vmatprep.subr.mxu0 0.0
      %759 = vmatpush1.msra.mxu0 0.0
      %760 = vmatprep.subr.mxu0 0.0
      %761 = vmatpush1.msra.mxu0 0.0
      %762 = vmatprep.subr.mxu0 0.0
      %763 = vmatpush1.msra.mxu0 0.0
      %764 = vmatprep.mubr.f32.mxu0 0.0
      %765 = vmatmul.mubr.f32.gmra.mrb[0].mxu0 %v676
      %v766 = vpop.f32.mrb[0].mxu0
      %v767 = vadd.f32 %v698, %v766
      %v768 = vpop.f32.mrb[0].mxu0
      %769 = vdwg.mxu0
      %770 = vst [vmem:[#allocation9] sm:$0xff] %v767
    $region37: #{tpu_custom_call.1} parent=1 // pred_fallthru
      _
    // Predicated region
    $region38: #{tpu_custom_call.1} parent=1 // pred_check
      _
    $region39: #{tpu_custom_call.1} parent=1 // pred_check_branch
      %772 = sbr.rel (0) target = $region41
    $region40: #{tpu_custom_call.1} parent=1 // pred_region
      %s774 = ssub.s32 128, 128
      %775 = vsyncadd [#allocation5], %s774
      %s777 = sshll.u32 [#allocation9], 4
      %s778 = int_to_ptr.vmem [resolvable:$true] %s777
      %780 = dma.vmem_to_hbm [thread:$0]  %s778, 128, %s4, [#allocation5]
    $region41: #{tpu_custom_call.1} parent=1 // pred_fallthru
      _
    // Predicated region
    $region42: #{tpu_custom_call.1} parent=1 // pred_check
      _
    $region43: #{tpu_custom_call.1} parent=1 // pred_check_branch
      %782 = sbr.rel (0) target = $region45
    $region44: #{tpu_custom_call.1} parent=1 // pred_region
      %783 = dma.done [#allocation5], 128
    $region45: #{tpu_custom_call.1} parent=1 // pred_fallthru
      _
    %784 = vsyncpa [#allocation4], 1
    %785 = vsyncpa [#allocation7], 1
    %786 = vsyncpa [#allocation5], 1

</llo_original>
